<compile_context>
chip_gen: v7x
topology: tpu7x:2x2x1
jax: 0.10.0
libtpu: 0.0.40
codegen_flags: <defaults>
</compile_context>

<pallas_src>
import jax
import jax.numpy as jnp
from jax.experimental import pallas as pl
from jax.experimental.pallas import tpu as pltpu


def _min_pool_kernel(x_ref, mask_ref, o_ref):
    # x_ref:    (Bt, St, Ht)  activation tile
    # mask_ref: (Bt, St, 1)   integer attention-mask tile (original dtype)
    # o_ref:    (Bt, Ht)      resident min accumulator (same block for all s)
    s = pl.program_id(2)

    x = x_ref[...]
    m = mask_ref[...]
    fill = jnp.asarray(0.0001, x.dtype)
    masked = jnp.where(m == 0, fill, x)        # (Bt,St,1) splat across H lanes
    blk_min = jnp.min(masked, axis=1)          # (Bt, Ht)

    @pl.when(s == 0)
    def _():
        o_ref[...] = blk_min                   # first S block initializes

    @pl.when(s != 0)
    def _():
        o_ref[...] = jnp.minimum(o_ref[...], blk_min)


def _largest_divisor(n, limit, multiple_of):
    """Largest divisor of n that is <= limit and a multiple of `multiple_of`."""
    best = None
    d = 1
    while d * d <= n:
        if n % d == 0:
            for c in (d, n // d):
                if c <= limit and c % multiple_of == 0:
                    if best is None or c > best:
                        best = c
        d += 1
    return best


def _choose_tiles(B, S, H, elem_bytes, block_budget_bytes):
    # H tile: lane-dense output stores (multiple of 128, up to 2048), or the
    # full H if it isn't 128-aligned (BlockSpec (8,128) rule).
    if H % 128 == 0:
        Ht = _largest_divisor(H, min(H, 2048), 128) or H
    else:
        Ht = H
    # B tile: full batch when small / non-8-aligned (also packs several rows
    # per step to amortize per-step overhead for tiny shapes), else 8 so the
    # output block's second-to-last dim stays legal and B becomes a parallel
    # grid axis for the second TensorCore on v7x.
    Bt = B if (B <= 8 or B % 8 != 0) else 8
    # S tile: largest multiple-of-8 divisor of S keeping one x block under the
    # per-buffer VMEM budget (budget re-derived conservatively for v7x's
    # 64 MiB physical / 32 MiB scoped VMEM, double-buffering included).
    if S % 8 == 0:
        max_st = max(8, block_budget_bytes // max(1, Bt * Ht * elem_bytes))
        St = _largest_divisor(S, min(S, max_st), 8) or S
    else:
        St = S
    return Bt, St, Ht


def min_pooling(last_hidden_state: jax.Array, attention_mask: jax.Array,
                *, block_budget_bytes: int = 4 * 1024 * 1024) -> jax.Array:
    """last_hidden_state: (B, S, H) float; attention_mask: (B, S) int -> (B, H)."""
    B, S, H = last_hidden_state.shape
    dtype = last_hidden_state.dtype
    dtype_bytes = jnp.dtype(dtype).itemsize
    # v5e has no native bf16 VPU ops (compare/min run in f32): budget tiles as
    # if elements were 4 bytes so bf16 inputs don't spill vregs there.
    elem_bytes = max(dtype_bytes, 4)

    Bt, St, Ht = _choose_tiles(B, S, H, elem_bytes, block_budget_bytes)

    # Keep the mask in its original integer dtype; put S on the sublane axis.
    mask3 = attention_mask.reshape(B, S, 1)

    grid = (B // Bt, H // Ht, S // St)

    cost = pl.CostEstimate(
        flops=2 * B * S * H,                     # where + min
        transcendentals=0,
        bytes_accessed=(B * S * H * dtype_bytes
                        + B * S * attention_mask.dtype.itemsize
                        + B * H * dtype_bytes),
    )

    return pl.pallas_call(
        _min_pool_kernel,
        out_shape=jax.ShapeDtypeStruct((B, H), dtype),
        grid_spec=pltpu.PrefetchScalarGridSpec(
            num_scalar_prefetch=0,
            grid=grid,
            in_specs=[
                pl.BlockSpec((Bt, St, Ht), lambda b, h, s: (b, s, h)),
                pl.BlockSpec((Bt, St, 1), lambda b, h, s: (b, s, 0)),
            ],
            # Output block ignores s -> resident accumulator across the
            # reduction axis; written back to HBM once per (b, h) tile.
            out_specs=pl.BlockSpec((Bt, Ht), lambda b, h, s: (b, h)),
        ),
        compiler_params=pltpu.CompilerParams(
            dimension_semantics=("parallel", "parallel", "arbitrary"),
        ),
        cost_estimate=cost,
    )(last_hidden_state, mask3)


def _reference(last_hidden_state, attention_mask):
    mask = attention_mask.astype(last_hidden_state.dtype)[..., None]
    emb = jnp.where(mask == 0.0, jnp.asarray(0.0001, last_hidden_state.dtype),
                    last_hidden_state)
    return jnp.min(emb, axis=1)


if __name__ == "__main__":
    key = jax.random.PRNGKey(0)

    # Small shape matching the module's typical use: (B, S, H).
    B, S, H = 2, 8, 32
    k1, k2 = jax.random.split(key)
    x = jax.random.normal(k1, (B, S, H), dtype=jnp.float32)
    lengths = jnp.array([6, 4], dtype=jnp.int32)
    attention_mask = (jnp.arange(S)[None, :] < lengths[:, None]).astype(jnp.int32)

    out = min_pooling(x, attention_mask)
    jax.block_until_ready(out)
    assert out.shape == (B, H)
    assert jnp.allclose(out, _reference(x, attention_mask), atol=1e-6), "mismatch (small)"

    # Second (still small) shape that forces multiple S blocks, exercising the
    # resident-accumulator path (shrunk block budget -> grid S extent 4).
    B2, S2, H2 = 2, 256, 256
    k3, k4 = jax.random.split(k2)
    x2 = jax.random.normal(k3, (B2, S2, H2), dtype=jnp.float32)
    lengths2 = jnp.array([200, 97], dtype=jnp.int32)
    mask2 = (jnp.arange(S2)[None, :] < lengths2[:, None]).astype(jnp.int32)

    out2 = min_pooling(x2, mask2, block_budget_bytes=128 * 1024)
    jax.block_until_ready(out2)
    assert out2.shape == (B2, H2)
    assert jnp.allclose(out2, _reference(x2, mask2), atol=1e-6), "mismatch (tiled)"

    print("KERNEL_OK")
</pallas_src>

<mosaic_0001>
module attributes {stable_mosaic.version = 11 : i64} {
  func.func @_min_pool_kernel(%arg0: i32, %arg1: i32, %arg2: i32, %arg3: memref<2x8x32xf32, #tpu.memory_space<vmem>>, %arg4: memref<2x8x1xi32, #tpu.memory_space<vmem>>, %arg5: memref<2x32xf32, #tpu.memory_space<vmem>>) attributes {dimension_semantics = [#tpu.dimension_semantics<parallel>, #tpu.dimension_semantics<parallel>, #tpu.dimension_semantics<arbitrary>], iteration_bounds = array<i64: 1, 1, 1>, scalar_prefetch = 0 : i64, scratch_operands = 0 : i64, tpu.core_type = #tpu.core_type<tc>, window_params = [{transform_indices = @transform_0, window_bounds = array<i64: 2, 8, 32>}, {transform_indices = @transform_1, window_bounds = array<i64: 2, 8, 1>}, {transform_indices = @transform_2, window_bounds = array<i64: 2, 32>}]} {
    %c0 = arith.constant 0 : index
    %c0_0 = arith.constant 0 : index
    %c0_1 = arith.constant 0 : index
    %0 = vector.load %arg3[%c0, %c0_0, %c0_1] : memref<2x8x32xf32, #tpu.memory_space<vmem>>, vector<2x8x32xf32>
    %c0_2 = arith.constant 0 : index
    %c0_3 = arith.constant 0 : index
    %c0_4 = arith.constant 0 : index
    %1 = vector.load %arg4[%c0_2, %c0_3, %c0_4] : memref<2x8x1xi32, #tpu.memory_space<vmem>>, vector<2x8x1xi32>
    %c0_i32 = arith.constant 0 : i32
    %2 = vector.broadcast %c0_i32 : i32 to vector<2x8x1xi32>
    %3 = arith.cmpi eq, %1, %2 : vector<2x8x1xi32>
    %cst = arith.constant 9.99999974E-5 : f32
    %4 = vector.shape_cast %3 : vector<2x8x1xi1> to vector<2x8x1xi1>
    %5 = vector.broadcast %4 : vector<2x8x1xi1> to vector<2x8x32xi1>
    %6 = vector.broadcast %cst : f32 to vector<2x8x32xf32>
    %7 = arith.select %5, %6, %0 : vector<2x8x32xi1>, vector<2x8x32xf32>
    %cst_5 = arith.constant dense<0x7F800000> : vector<2x32xf32>
    %8 = vector.multi_reduction <minimumf>, %7, %cst_5 [1] : vector<2x8x32xf32> to vector<2x32xf32>
    %c0_i32_6 = arith.constant 0 : i32
    %9 = arith.cmpi eq, %arg2, %c0_i32_6 : i32
    %10 = arith.extui %9 : i1 to i32
    %c0_i32_7 = arith.constant 0 : i32
    %11 = arith.cmpi ne, %10, %c0_i32_7 : i32
    scf.if %11 {
      %c0_10 = arith.constant 0 : index
      %c0_11 = arith.constant 0 : index
      %15 = vector.load %arg5[%c0_10, %c0_11] : memref<2x32xf32, #tpu.memory_space<vmem>>, vector<2x32xf32>
      tpu.vector_store %arg5[%c0_10, %c0_11], %8 {strides = array<i32>} : memref<2x32xf32, #tpu.memory_space<vmem>>, vector<2x32xf32>,
    } else {
    }
    %c0_i32_8 = arith.constant 0 : i32
    %12 = arith.cmpi ne, %arg2, %c0_i32_8 : i32
    %13 = arith.extui %12 : i1 to i32
    %c0_i32_9 = arith.constant 0 : i32
    %14 = arith.cmpi ne, %13, %c0_i32_9 : i32
    scf.if %14 {
      %c0_10 = arith.constant 0 : index
      %c0_11 = arith.constant 0 : index
      %15 = vector.load %arg5[%c0_10, %c0_11] : memref<2x32xf32, #tpu.memory_space<vmem>>, vector<2x32xf32>
      %16 = arith.minimumf %15, %8 : vector<2x32xf32>
      %c0_12 = arith.constant 0 : index
      %c0_13 = arith.constant 0 : index
      %17 = vector.load %arg5[%c0_12, %c0_13] : memref<2x32xf32, #tpu.memory_space<vmem>>, vector<2x32xf32>
      tpu.vector_store %arg5[%c0_12, %c0_13], %16 {strides = array<i32>} : memref<2x32xf32, #tpu.memory_space<vmem>>, vector<2x32xf32>,
    } else {
    }
    return
  }
  func.func @transform_0(%arg0: i32, %arg1: i32, %arg2: i32) -> (i32, i32, i32) {
    %c0_i32 = arith.constant 0 : i32
    return %arg0, %arg2, %arg1 : i32, i32, i32
  }
  func.func @transform_1(%arg0: i32, %arg1: i32, %arg2: i32) -> (i32, i32, i32) {
    %c0_i32 = arith.constant 0 : i32
    %c0_i32_0 = arith.constant 0 : i32
    return %arg0, %arg2, %c0_i32 : i32, i32, i32
  }
  func.func @transform_2(%arg0: i32, %arg1: i32, %arg2: i32) -> (i32, i32) {
    %c0_i32 = arith.constant 0 : i32
    return %arg0, %arg1 : i32, i32
  }
}

</mosaic_0001>

<llo_original>
// kernel: tpu_custom_call.1
$region0: #{tpu_custom_call.1}
  #allocation0 [shape = 'u32[]', space=smem, size = 0x4, offset = 0x4, fixed_abs, tag = 'smem constant byte address 0x4 - core index']
  #allocation1 [shape = 'u32[144,128]{1,0:T(1,128)}', space=vmem, size = 0x12000, scoped, tag = 'internal scratch']
  %s0 = inlined_call_operand.vmem [shape: f32[2,8,32], index: 0, kind: input, shape index: {}]
  %s1 = inlined_call_operand.vmem [shape: s32[2,8,1], index: 1, kind: input, shape index: {}]
  %s2 = inlined_call_operand.hbm [shape: f32[2,32], index: 2, kind: output, shape index: {}]
  %s3 = sld [smem:[#allocation0]]
  $region26: #{tpu_custom_call.1} parent=0
    _
  %s5 = ssub.s32 1, %s3
  %s6 = scalar_select 0, %s5, %s3
  $region1: #{tpu_custom_call.1} parent=0
    #allocation2 [shape = 'u8[1024]{0}', space=vmem, size = 0x400, scoped, tag = 'output window, operand 0, single buffered']
    #allocation3 [shape = 's32[1]{0}', space=sflag, size = 0x4, scoped, tag = 'scoped memory for tpu_custom_call.1']
    %7 = vsyncpa [#allocation3], 0
    // Predicated region
    $region2: #{tpu_custom_call.1} parent=1 // pred_check
      _
    $region3: #{tpu_custom_call.1} parent=1 // pred_check_branch
      %9 = sbr.rel (0) target = $region5
    $region4: #{tpu_custom_call.1} parent=1 // pred_region
      _
    $region5: #{tpu_custom_call.1} parent=1 // pred_fallthru
      _
    // Predicated region
    $region6: #{tpu_custom_call.1} parent=1 // pred_check
      _
    $region7: #{tpu_custom_call.1} parent=1 // pred_check_branch
      %11 = sbr.rel (0) target = $region9
    $region8: #{tpu_custom_call.1} parent=1 // pred_region
      _
    $region9: #{tpu_custom_call.1} parent=1 // pred_fallthru
      _
    %v12 = vld [vmem:[%s0] sm:$0xff]
    %v13 = vld [vmem:[%s0 + $0x8] sm:$0xff]
    %v14 = vld [vmem:[%s1] sm:$0xff]
    %v15 = vld [vmem:[%s1 + $0x8] sm:$0xff]
    %vm16 = vcmp.eq.s32.totalorder %v14, 0
    %vm17 = vcmp.eq.s32.totalorder %v15, 0
    %v18 = vsel %vm16, 1, 0
    %v19 = vsel %vm17, 1, 0
    %20 = vset.pattern.permute.xlu0 0
    %21 = vperm.xlu0 %20, %v18
    %v22 = vpop.permute.xlu0 %21
    %23 = vset.pattern.permute.xlu0 0
    %24 = vperm.xlu0 %23, %v19
    %v25 = vpop.permute.xlu0 %24
    %vm26 = vcmp.eq.s32.totalorder %v22, 1
    %vm27 = vcmp.eq.s32.totalorder %v25, 1
    %v28 = vsel %vm26, 0.0001, %v12
    %v29 = vsel %vm27, 0.0001, %v13
    %vm30 = vcmask 261120
    %v31 = vsel %vm30, %v28, inf
    %v32 = vrot.slane %v31, 4
    %v33 = vmin.f32 %v31, %v32
    %v34 = vrot.slane %v33, 2
    %v35 = vmin.f32 %v33, %v34
    %v36 = vrot.slane %v35, 1
    %v37 = vmin.f32 %v35, %v36
    %v38 = vsel %vm30, %v29, inf
    %v39 = vrot.slane %v38, 4
    %v40 = vmin.f32 %v38, %v39
    %v41 = vrot.slane %v40, 2
    %v42 = vmin.f32 %v40, %v41
    %v43 = vrot.slane %v42, 1
    %v44 = vmin.f32 %v42, %v43
    %p45 = scmp.eq.s32.totalorder 0, 0
    // Predicated region
    $region10: #{tpu_custom_call.1} parent=1 // pred_check
      %p46 = pneg %p45
    $region11: #{tpu_custom_call.1} parent=1 // pred_check_branch
      %48 = sbr.rel (%p46) target = $region13
    $region12: #{tpu_custom_call.1} parent=1 // pred_region
      %vm51 = vcmask 1041409
      %v52 = vsel %vm51, %v44, %v37
      %vm54 = vcmask 254976
      %55 = vst.msk [vmem:[#allocation2] sm:$0x3] %vm54, %v52
    $region13: #{tpu_custom_call.1} parent=1 // pred_fallthru
      _
    %p56 = scmp.ne.s32.totalorder 0, 0
    // Predicated region
    $region14: #{tpu_custom_call.1} parent=1 // pred_check
      %p57 = pneg %p56
    $region15: #{tpu_custom_call.1} parent=1 // pred_check_branch
      %59 = sbr.rel (%p57) target = $region17
    $region16: #{tpu_custom_call.1} parent=1 // pred_region
      %v60 = vld [vmem:[#allocation2] sm:$0x3]
      %vm63 = vcmask 1041409
      %v64 = vsel %vm63, %v44, %v37
      %v66 = vmin.f32 %v60, %v64
      %vm67 = vcmask 254976
      %68 = vst.msk [vmem:[#allocation2] sm:$0x3] %vm67, %v66
    $region17: #{tpu_custom_call.1} parent=1 // pred_fallthru
      _
    // Predicated region
    $region18: #{tpu_custom_call.1} parent=1 // pred_check
      _
    $region19: #{tpu_custom_call.1} parent=1 // pred_check_branch
      %70 = sbr.rel (0) target = $region21
    $region20: #{tpu_custom_call.1} parent=1 // pred_region
      %s72 = ssub.s32 32, 32
      %73 = vsyncadd [#allocation3], %s72
      %s75 = sshll.u32 [#allocation2], 4
      %s76 = int_to_ptr.vmem [resolvable:$true] %s75
      %78 = dma.vmem_to_hbm [thread:$0]  %s76, 32, %s2, [#allocation3]
    $region21: #{tpu_custom_call.1} parent=1 // pred_fallthru
      _
    // Predicated region
    $region22: #{tpu_custom_call.1} parent=1 // pred_check
      _
    $region23: #{tpu_custom_call.1} parent=1 // pred_check_branch
      %80 = sbr.rel (0) target = $region25
    $region24: #{tpu_custom_call.1} parent=1 // pred_region
      %81 = dma.done [#allocation3], 32
    $region25: #{tpu_custom_call.1} parent=1 // pred_fallthru
      _
    %82 = vsyncpa [#allocation3], 1

</llo_original>
